<compile_context>
chip_gen: v7x
topology: tpu7x:2x2x1
jax: 0.10.0
libtpu: 0.0.40
codegen_flags: <defaults>
</compile_context>

<pallas_src>
import jax
import jax.numpy as jnp
from jax import lax
from jax.experimental import pallas as pl
from jax.experimental.pallas import tpu as pltpu


def _attention_kernel(q_ref, k_ref, v_ref, m_ref, o_ref):
    # q_ref: (BT, H)       batch-major query rows
    # k_ref: (L, BT, H)    native (seq, batch, feat) layout
    # v_ref: (L, BT, Dv)   native (seq, batch, feat) layout
    # m_ref: (BT, L)       0/1 mask, native PyTorch layout
    # o_ref: (BT, Dv)      context rows
    L = k_ref.shape[0]
    q = q_ref[...].astype(jnp.float32)                         # (BT, H)

    # energy[b, l] = sum_h q[b, h] * k[l, b, h]
    # Unrolled over the small static L axis: no (L, BT, H) f32 temporary.
    cols = []
    for l in range(L):
        kl = k_ref[l].astype(jnp.float32)                      # (BT, H)
        cols.append(jnp.sum(q * kl, axis=-1, keepdims=True))   # (BT, 1)
    energy = jnp.concatenate(cols, axis=-1)                    # (BT, L) f32

    m = m_ref[...].astype(jnp.float32)                         # (BT, L)

    # softmax over L, then mask, then L1 renormalization -- fused exactly:
    #   softmax = p / Z; masked = p*m / Z
    #   out = masked / max(||masked||_1, 1e-12) = p*m / max(sum|p*m|, Z*1e-12)
    e_max = jnp.max(energy, axis=-1, keepdims=True)            # (BT, 1)
    p = jnp.exp(energy - e_max)                                # (BT, L)
    z = jnp.sum(p, axis=-1, keepdims=True)                     # softmax denominator
    pm = p * m
    s = jnp.sum(jnp.abs(pm), axis=-1, keepdims=True)           # L1 mass after masking
    denom = jnp.maximum(s, z * 1e-12)                          # == F.normalize clamp
    w = pm * pl.reciprocal(denom, approx=False)                # (BT, L); exact recip

    # context[b, d] = sum_l w[b, l] * v[l, b, d]
    # Again an unrolled accumulation over L: no (L, BT, Dv) f32 temporary.
    acc = jnp.zeros(o_ref.shape, jnp.float32)                  # (BT, Dv)
    for l in range(L):
        vl = v_ref[l].astype(jnp.float32)                      # (BT, Dv)
        acc = acc + w[:, l:l + 1] * vl
    o_ref[...] = acc.astype(o_ref.dtype)


def _tpu_hw():
    """Return (vmem_capacity_bytes, tensorcores_per_device) with safe fallbacks."""
    vmem = None
    cores = None
    try:
        info = pltpu.get_tpu_info()
        vmem = getattr(info, "vmem_capacity_bytes", None)
        for name in ("num_cores", "core_count", "num_tensorcores",
                     "tensorcore_count", "cores_per_chip"):
            val = getattr(info, name, None)
            if isinstance(val, int) and val > 0:
                cores = val
                break
    except Exception:
        pass
    kind = ""
    try:
        kind = jax.devices()[0].device_kind.lower()
    except Exception:
        pass
    if vmem is None or vmem <= 0:
        if "v7" in kind:
            vmem = 64 * 1024 * 1024
        elif any(t in kind for t in ("v4", "v5", "v6")):
            vmem = 128 * 1024 * 1024
        else:
            vmem = 64 * 1024 * 1024          # conservative default
    if cores is None or cores <= 0:
        # v5e / v6e expose one TensorCore per device; v7x (and v3/v4/v5p
        # megacore) expose two.  Default to 2 when unknown: one extra grid
        # step costs ~0.35us, a missed split on a 2-TC part costs up to 2x.
        single_tc = any(t in kind for t in ("v5 lite", "v5e", "v6"))
        cores = 1 if single_tc else 2
    return int(vmem), int(cores)


def _pick_b_tile(B, L, H, Dv, in_itemsize, out_itemsize, vmem_limit, num_cores,
                 requested=None):
    # True per-row VMEM footprint: double-buffered inputs + output, plus the
    # in-kernel f32 upcasts/temporaries (q, per-l k/v rows, softmax buffers,
    # accumulator) -- so bf16/fp16 inputs don't under-provision the budget.
    row_in = (L * H + L * Dv + H + L) * in_itemsize
    row_out = Dv * out_itemsize
    row_f32 = (2 * H + 2 * Dv + 8 * L) * 4
    row_bytes = 2 * row_in + 2 * row_out + row_f32
    vmem_rows = max(8, int(0.85 * vmem_limit) // max(1, row_bytes))

    if requested is not None:
        bt = max(1, min(B, int(requested)))
        if bt < B:
            bt = max(8, (bt // 8) * 8)       # partial blocks must be sublane-aligned
        return bt

    bt = min(B, vmem_rows, 2048)             # big blocks amortize ~0.35us/step
    if num_cores > 1 and B > 8:
        # Ensure the batch grid has >= num_cores (roughly balanced) steps so
        # the "parallel" axis shards across all TensorCores (v7x / megacore).
        per_core = -(-B // num_cores)        # cdiv
        bt = min(bt, per_core)
    if bt < B:
        bt = max(8, ((bt + 7) // 8) * 8)
        bt = min(bt, B)
    return bt


def attention(query, key, value, mask, *, b_tile=None):
    """PyTorch-convention inputs:
       query: (1, B, H), key: (L, B, H), value: (L, B, Dv), mask: (B, L)
       returns context: (B, 1, Dv)
    """
    _, B, H = query.shape
    L = key.shape[0]
    Dv = value.shape[2]

    vmem_cap, num_cores = _tpu_hw()
    # Generation-aware scoped-VMEM cap: ~3/4 of physical per TensorCore
    # (~48 MiB on v7x's 64 MiB, ~96 MiB on v5e/v6e's 128 MiB), leaving
    # headroom for compiler-internal scratch.
    vmem_limit = int(min(96 * 1024 * 1024, (3 * vmem_cap) // 4))

    in_itemsize = jnp.dtype(key.dtype).itemsize
    out_itemsize = jnp.dtype(query.dtype).itemsize
    bt = _pick_b_tile(B, L, H, Dv, in_itemsize, out_itemsize, vmem_limit,
                      num_cores, requested=b_tile)
    grid = (pl.cdiv(B, bt),)

    q2d = query[0]                                   # (B, H), cheap squeeze
    mask2d = jnp.asarray(mask, query.dtype)          # tiny; native (B, L) layout
    # key / value stay in native (L, B, feat) layout -> no big HBM copies.

    bytes_accessed = (q2d.size * jnp.dtype(q2d.dtype).itemsize
                      + key.size * jnp.dtype(key.dtype).itemsize
                      + value.size * jnp.dtype(value.dtype).itemsize
                      + mask2d.size * jnp.dtype(mask2d.dtype).itemsize
                      + B * Dv * out_itemsize)
    cost = pl.CostEstimate(flops=int(B * (2 * L * H + 2 * L * Dv + 8 * L)),
                           transcendentals=int(B * L),
                           bytes_accessed=int(bytes_accessed))

    out2d = pl.pallas_call(
        _attention_kernel,
        out_shape=jax.ShapeDtypeStruct((B, Dv), query.dtype),
        grid_spec=pltpu.PrefetchScalarGridSpec(
            num_scalar_prefetch=0,
            grid=grid,
            in_specs=[
                pl.BlockSpec((bt, H), lambda b: (b, 0)),          # query (B, H)
                pl.BlockSpec((L, bt, H), lambda b: (0, b, 0)),    # key   (L, B, H)
                pl.BlockSpec((L, bt, Dv), lambda b: (0, b, 0)),   # value (L, B, Dv)
                pl.BlockSpec((bt, L), lambda b: (b, 0)),          # mask  (B, L)
            ],
            out_specs=pl.BlockSpec((bt, Dv), lambda b: (b, 0)),   # (B, Dv)
        ),
        compiler_params=pltpu.CompilerParams(
            dimension_semantics=("parallel",),
            vmem_limit_bytes=vmem_limit),
        cost_estimate=cost,
    )(q2d, key, value, mask2d)

    return out2d[:, None, :]                          # (B, 1, Dv), PyTorch shape


def _reference(query, key, value, mask):
    # Pure-JAX mirror of the PyTorch forward, for correctness checking.
    k = jnp.transpose(key, (1, 2, 0))        # (B, H, L)
    q = jnp.transpose(query, (1, 0, 2))      # (B, 1, H)
    energy = jnp.einsum('bqh,bhl->bql', q, k, precision=lax.Precision.HIGHEST)
    attn = jax.nn.softmax(energy, axis=2)
    attn = attn * mask[:, None, :]
    denom = jnp.maximum(jnp.sum(jnp.abs(attn), axis=2, keepdims=True), 1e-12)
    norm_attn = attn / denom
    tv = jnp.transpose(value, (1, 0, 2))     # (B, L, Dv)
    return jnp.einsum('bql,bld->bqd', norm_attn, tv,
                      precision=lax.Precision.HIGHEST)


if __name__ == "__main__":
    # Shapes consistent with the module: B=2, L=8, H=Dv=128.
    B, L, H, Dv = 2, 8, 128, 128
    root = jax.random.PRNGKey(0)
    kq, kk, kv, kq2, kk2, kv2, kl2 = jax.random.split(root, 7)

    # Scale queries so energies are O(1): keeps the f32 reference comparison tight.
    query = 0.1 * jax.random.normal(kq, (1, B, H), dtype=jnp.float32)   # 1 x B x H
    key_t = jax.random.normal(kk, (L, B, H), dtype=jnp.float32)         # L x B x H
    value = jax.random.normal(kv, (L, B, Dv), dtype=jnp.float32)        # L x B x Dv
    # Length-style 0/1 mask: batch 0 sees all L, batch 1 sees first 5 positions.
    lengths = jnp.array([L, 5])
    mask = (jnp.arange(L)[None, :] < lengths[:, None]).astype(jnp.float32)  # B x L

    ctx = jax.block_until_ready(attention(query, key_t, value, mask))
    ref = _reference(query, key_t, value, mask)
    assert ctx.shape == (B, 1, Dv)
    assert jnp.allclose(ctx, ref, atol=1e-5, rtol=1e-5)

    # Second config: larger batch; auto-tiled (core-split on 2-TC parts) and a
    # forced multi-step grid with a ragged final batch block.
    B2 = 200
    q2 = 0.1 * jax.random.normal(kq2, (1, B2, H), dtype=jnp.float32)
    k2 = jax.random.normal(kk2, (L, B2, H), dtype=jnp.float32)
    v2 = jax.random.normal(kv2, (L, B2, Dv), dtype=jnp.float32)
    lengths2 = jax.random.randint(kl2, (B2,), 1, L + 1)
    mask2 = (jnp.arange(L)[None, :] < lengths2[:, None]).astype(jnp.float32)

    ctx2 = jax.block_until_ready(attention(q2, k2, v2, mask2))            # auto tile
    ctx3 = jax.block_until_ready(attention(q2, k2, v2, mask2, b_tile=72)) # ragged grid
    ref2 = _reference(q2, k2, v2, mask2)
    assert ctx2.shape == (B2, 1, Dv)
    assert jnp.allclose(ctx2, ref2, atol=1e-5, rtol=1e-5)
    assert jnp.allclose(ctx3, ref2, atol=1e-5, rtol=1e-5)

    print("KERNEL_OK")
</pallas_src>

<mosaic_0001>
module attributes {stable_mosaic.version = 11 : i64} {
  func.func @_attention_kernel(%arg0: i32, %arg1: memref<2x128xf32, #tpu.memory_space<vmem>>, %arg2: memref<8x2x128xf32, #tpu.memory_space<vmem>>, %arg3: memref<8x2x128xf32, #tpu.memory_space<vmem>>, %arg4: memref<2x8xf32, #tpu.memory_space<vmem>>, %arg5: memref<2x128xf32, #tpu.memory_space<vmem>>) attributes {dimension_semantics = [#tpu.dimension_semantics<parallel>], iteration_bounds = array<i64: 1>, scalar_prefetch = 0 : i64, scratch_operands = 0 : i64, tpu.core_type = #tpu.core_type<tc>, window_params = [{transform_indices = @transform_0, window_bounds = array<i64: 2, 128>}, {transform_indices = @transform_1, window_bounds = array<i64: 8, 2, 128>}, {transform_indices = @transform_2, window_bounds = array<i64: 8, 2, 128>}, {transform_indices = @transform_3, window_bounds = array<i64: 2, 8>}, {transform_indices = @transform_4, window_bounds = array<i64: 2, 128>}]} {
    %c0 = arith.constant 0 : index
    %c0_0 = arith.constant 0 : index
    %0 = vector.load %arg1[%c0, %c0_0] : memref<2x128xf32, #tpu.memory_space<vmem>>, vector<2x128xf32>
    %c0_1 = arith.constant 0 : index
    %c0_2 = arith.constant 0 : index
    %c0_3 = arith.constant 0 : index
    %1 = vector.load %arg2[%c0_1, %c0_2, %c0_3] : memref<8x2x128xf32, #tpu.memory_space<vmem>>, vector<1x2x128xf32>
    %2 = vector.shape_cast %1 : vector<1x2x128xf32> to vector<2x128xf32>
    %3 = arith.mulf %0, %2 : vector<2x128xf32>
    %cst = arith.constant dense<0.000000e+00> : vector<2xf32>
    %4 = vector.multi_reduction <add>, %3, %cst [1] : vector<2x128xf32> to vector<2xf32>
    %5 = vector.shape_cast %4 : vector<2xf32> to vector<2x1xf32>
    %c1 = arith.constant 1 : index
    %c0_4 = arith.constant 0 : index
    %c0_5 = arith.constant 0 : index
    %6 = vector.load %arg2[%c1, %c0_4, %c0_5] : memref<8x2x128xf32, #tpu.memory_space<vmem>>, vector<1x2x128xf32>
    %7 = vector.shape_cast %6 : vector<1x2x128xf32> to vector<2x128xf32>
    %8 = arith.mulf %0, %7 : vector<2x128xf32>
    %cst_6 = arith.constant dense<0.000000e+00> : vector<2xf32>
    %9 = vector.multi_reduction <add>, %8, %cst_6 [1] : vector<2x128xf32> to vector<2xf32>
    %10 = vector.shape_cast %9 : vector<2xf32> to vector<2x1xf32>
    %c2 = arith.constant 2 : index
    %c0_7 = arith.constant 0 : index
    %c0_8 = arith.constant 0 : index
    %11 = vector.load %arg2[%c2, %c0_7, %c0_8] : memref<8x2x128xf32, #tpu.memory_space<vmem>>, vector<1x2x128xf32>
    %12 = vector.shape_cast %11 : vector<1x2x128xf32> to vector<2x128xf32>
    %13 = arith.mulf %0, %12 : vector<2x128xf32>
    %cst_9 = arith.constant dense<0.000000e+00> : vector<2xf32>
    %14 = vector.multi_reduction <add>, %13, %cst_9 [1] : vector<2x128xf32> to vector<2xf32>
    %15 = vector.shape_cast %14 : vector<2xf32> to vector<2x1xf32>
    %c3 = arith.constant 3 : index
    %c0_10 = arith.constant 0 : index
    %c0_11 = arith.constant 0 : index
    %16 = vector.load %arg2[%c3, %c0_10, %c0_11] : memref<8x2x128xf32, #tpu.memory_space<vmem>>, vector<1x2x128xf32>
    %17 = vector.shape_cast %16 : vector<1x2x128xf32> to vector<2x128xf32>
    %18 = arith.mulf %0, %17 : vector<2x128xf32>
    %cst_12 = arith.constant dense<0.000000e+00> : vector<2xf32>
    %19 = vector.multi_reduction <add>, %18, %cst_12 [1] : vector<2x128xf32> to vector<2xf32>
    %20 = vector.shape_cast %19 : vector<2xf32> to vector<2x1xf32>
    %c4 = arith.constant 4 : index
    %c0_13 = arith.constant 0 : index
    %c0_14 = arith.constant 0 : index
    %21 = vector.load %arg2[%c4, %c0_13, %c0_14] : memref<8x2x128xf32, #tpu.memory_space<vmem>>, vector<1x2x128xf32>
    %22 = vector.shape_cast %21 : vector<1x2x128xf32> to vector<2x128xf32>
    %23 = arith.mulf %0, %22 : vector<2x128xf32>
    %cst_15 = arith.constant dense<0.000000e+00> : vector<2xf32>
    %24 = vector.multi_reduction <add>, %23, %cst_15 [1] : vector<2x128xf32> to vector<2xf32>
    %25 = vector.shape_cast %24 : vector<2xf32> to vector<2x1xf32>
    %c5 = arith.constant 5 : index
    %c0_16 = arith.constant 0 : index
    %c0_17 = arith.constant 0 : index
    %26 = vector.load %arg2[%c5, %c0_16, %c0_17] : memref<8x2x128xf32, #tpu.memory_space<vmem>>, vector<1x2x128xf32>
    %27 = vector.shape_cast %26 : vector<1x2x128xf32> to vector<2x128xf32>
    %28 = arith.mulf %0, %27 : vector<2x128xf32>
    %cst_18 = arith.constant dense<0.000000e+00> : vector<2xf32>
    %29 = vector.multi_reduction <add>, %28, %cst_18 [1] : vector<2x128xf32> to vector<2xf32>
    %30 = vector.shape_cast %29 : vector<2xf32> to vector<2x1xf32>
    %c6 = arith.constant 6 : index
    %c0_19 = arith.constant 0 : index
    %c0_20 = arith.constant 0 : index
    %31 = vector.load %arg2[%c6, %c0_19, %c0_20] : memref<8x2x128xf32, #tpu.memory_space<vmem>>, vector<1x2x128xf32>
    %32 = vector.shape_cast %31 : vector<1x2x128xf32> to vector<2x128xf32>
    %33 = arith.mulf %0, %32 : vector<2x128xf32>
    %cst_21 = arith.constant dense<0.000000e+00> : vector<2xf32>
    %34 = vector.multi_reduction <add>, %33, %cst_21 [1] : vector<2x128xf32> to vector<2xf32>
    %35 = vector.shape_cast %34 : vector<2xf32> to vector<2x1xf32>
    %c7 = arith.constant 7 : index
    %c0_22 = arith.constant 0 : index
    %c0_23 = arith.constant 0 : index
    %36 = vector.load %arg2[%c7, %c0_22, %c0_23] : memref<8x2x128xf32, #tpu.memory_space<vmem>>, vector<1x2x128xf32>
    %37 = vector.shape_cast %36 : vector<1x2x128xf32> to vector<2x128xf32>
    %38 = arith.mulf %0, %37 : vector<2x128xf32>
    %cst_24 = arith.constant dense<0.000000e+00> : vector<2xf32>
    %39 = vector.multi_reduction <add>, %38, %cst_24 [1] : vector<2x128xf32> to vector<2xf32>
    %40 = vector.shape_cast %39 : vector<2xf32> to vector<2x1xf32>
    %41 = tpu.concatenate %5, %10, %15, %20, %25, %30, %35, %40 in 1 : vector<2x1xf32>, vector<2x1xf32>, vector<2x1xf32>, vector<2x1xf32>, vector<2x1xf32>, vector<2x1xf32>, vector<2x1xf32>, vector<2x1xf32> -> vector<2x8xf32>
    %c0_25 = arith.constant 0 : index
    %c0_26 = arith.constant 0 : index
    %42 = vector.load %arg4[%c0_25, %c0_26] : memref<2x8xf32, #tpu.memory_space<vmem>>, vector<2x8xf32>
    %cst_27 = arith.constant dense<0xFF800000> : vector<2xf32>
    %43 = vector.multi_reduction <maximumf>, %41, %cst_27 [1] : vector<2x8xf32> to vector<2xf32>
    %44 = vector.shape_cast %43 : vector<2xf32> to vector<2x1xf32>
    %45 = vector.broadcast %44 : vector<2x1xf32> to vector<2x8xf32>
    %46 = arith.subf %41, %45 : vector<2x8xf32>
    %47 = math.exp %46 : vector<2x8xf32>
    %cst_28 = arith.constant dense<0.000000e+00> : vector<2xf32>
    %48 = vector.multi_reduction <add>, %47, %cst_28 [1] : vector<2x8xf32> to vector<2xf32>
    %49 = vector.shape_cast %48 : vector<2xf32> to vector<2x1xf32>
    %50 = arith.mulf %47, %42 : vector<2x8xf32>
    %51 = math.absf %50 : vector<2x8xf32>
    %cst_29 = arith.constant dense<0.000000e+00> : vector<2xf32>
    %52 = vector.multi_reduction <add>, %51, %cst_29 [1] : vector<2x8xf32> to vector<2xf32>
    %53 = vector.shape_cast %52 : vector<2xf32> to vector<2x1xf32>
    %cst_30 = arith.constant 9.99999996E-13 : f32
    %54 = vector.broadcast %cst_30 : f32 to vector<2x1xf32>
    %55 = arith.mulf %49, %54 : vector<2x1xf32>
    %56 = arith.maximumf %53, %55 : vector<2x1xf32>
    %57 = tpu.reciprocal %56 : vector<2x1xf32> -> vector<2x1xf32>
    %58 = vector.broadcast %57 : vector<2x1xf32> to vector<2x8xf32>
    %59 = arith.mulf %50, %58 : vector<2x8xf32>
    %cst_31 = arith.constant 0.000000e+00 : f32
    %60 = vector.broadcast %cst_31 : f32 to vector<2x128xf32>
    %c0_32 = arith.constant 0 : index
    %c0_33 = arith.constant 0 : index
    %c0_34 = arith.constant 0 : index
    %61 = vector.load %arg3[%c0_32, %c0_33, %c0_34] : memref<8x2x128xf32, #tpu.memory_space<vmem>>, vector<1x2x128xf32>
    %62 = vector.shape_cast %61 : vector<1x2x128xf32> to vector<2x128xf32>
    %63 = vector.extract_strided_slice %59 {offsets = [0, 0], sizes = [2, 1], strides = [1, 1]} : vector<2x8xf32> to vector<2x1xf32>
    %64 = vector.broadcast %63 : vector<2x1xf32> to vector<2x128xf32>
    %65 = arith.mulf %64, %62 : vector<2x128xf32>
    %66 = arith.addf %60, %65 : vector<2x128xf32>
    %c1_35 = arith.constant 1 : index
    %c0_36 = arith.constant 0 : index
    %c0_37 = arith.constant 0 : index
    %67 = vector.load %arg3[%c1_35, %c0_36, %c0_37] : memref<8x2x128xf32, #tpu.memory_space<vmem>>, vector<1x2x128xf32>
    %68 = vector.shape_cast %67 : vector<1x2x128xf32> to vector<2x128xf32>
    %69 = vector.extract_strided_slice %59 {offsets = [0, 1], sizes = [2, 1], strides = [1, 1]} : vector<2x8xf32> to vector<2x1xf32>
    %70 = vector.broadcast %69 : vector<2x1xf32> to vector<2x128xf32>
    %71 = arith.mulf %70, %68 : vector<2x128xf32>
    %72 = arith.addf %66, %71 : vector<2x128xf32>
    %c2_38 = arith.constant 2 : index
    %c0_39 = arith.constant 0 : index
    %c0_40 = arith.constant 0 : index
    %73 = vector.load %arg3[%c2_38, %c0_39, %c0_40] : memref<8x2x128xf32, #tpu.memory_space<vmem>>, vector<1x2x128xf32>
    %74 = vector.shape_cast %73 : vector<1x2x128xf32> to vector<2x128xf32>
    %75 = vector.extract_strided_slice %59 {offsets = [0, 2], sizes = [2, 1], strides = [1, 1]} : vector<2x8xf32> to vector<2x1xf32>
    %76 = vector.broadcast %75 : vector<2x1xf32> to vector<2x128xf32>
    %77 = arith.mulf %76, %74 : vector<2x128xf32>
    %78 = arith.addf %72, %77 : vector<2x128xf32>
    %c3_41 = arith.constant 3 : index
    %c0_42 = arith.constant 0 : index
    %c0_43 = arith.constant 0 : index
    %79 = vector.load %arg3[%c3_41, %c0_42, %c0_43] : memref<8x2x128xf32, #tpu.memory_space<vmem>>, vector<1x2x128xf32>
    %80 = vector.shape_cast %79 : vector<1x2x128xf32> to vector<2x128xf32>
    %81 = vector.extract_strided_slice %59 {offsets = [0, 3], sizes = [2, 1], strides = [1, 1]} : vector<2x8xf32> to vector<2x1xf32>
    %82 = vector.broadcast %81 : vector<2x1xf32> to vector<2x128xf32>
    %83 = arith.mulf %82, %80 : vector<2x128xf32>
    %84 = arith.addf %78, %83 : vector<2x128xf32>
    %c4_44 = arith.constant 4 : index
    %c0_45 = arith.constant 0 : index
    %c0_46 = arith.constant 0 : index
    %85 = vector.load %arg3[%c4_44, %c0_45, %c0_46] : memref<8x2x128xf32, #tpu.memory_space<vmem>>, vector<1x2x128xf32>
    %86 = vector.shape_cast %85 : vector<1x2x128xf32> to vector<2x128xf32>
    %87 = vector.extract_strided_slice %59 {offsets = [0, 4], sizes = [2, 1], strides = [1, 1]} : vector<2x8xf32> to vector<2x1xf32>
    %88 = vector.broadcast %87 : vector<2x1xf32> to vector<2x128xf32>
    %89 = arith.mulf %88, %86 : vector<2x128xf32>
    %90 = arith.addf %84, %89 : vector<2x128xf32>
    %c5_47 = arith.constant 5 : index
    %c0_48 = arith.constant 0 : index
    %c0_49 = arith.constant 0 : index
    %91 = vector.load %arg3[%c5_47, %c0_48, %c0_49] : memref<8x2x128xf32, #tpu.memory_space<vmem>>, vector<1x2x128xf32>
    %92 = vector.shape_cast %91 : vector<1x2x128xf32> to vector<2x128xf32>
    %93 = vector.extract_strided_slice %59 {offsets = [0, 5], sizes = [2, 1], strides = [1, 1]} : vector<2x8xf32> to vector<2x1xf32>
    %94 = vector.broadcast %93 : vector<2x1xf32> to vector<2x128xf32>
    %95 = arith.mulf %94, %92 : vector<2x128xf32>
    %96 = arith.addf %90, %95 : vector<2x128xf32>
    %c6_50 = arith.constant 6 : index
    %c0_51 = arith.constant 0 : index
    %c0_52 = arith.constant 0 : index
    %97 = vector.load %arg3[%c6_50, %c0_51, %c0_52] : memref<8x2x128xf32, #tpu.memory_space<vmem>>, vector<1x2x128xf32>
    %98 = vector.shape_cast %97 : vector<1x2x128xf32> to vector<2x128xf32>
    %99 = vector.extract_strided_slice %59 {offsets = [0, 6], sizes = [2, 1], strides = [1, 1]} : vector<2x8xf32> to vector<2x1xf32>
    %100 = vector.broadcast %99 : vector<2x1xf32> to vector<2x128xf32>
    %101 = arith.mulf %100, %98 : vector<2x128xf32>
    %102 = arith.addf %96, %101 : vector<2x128xf32>
    %c7_53 = arith.constant 7 : index
    %c0_54 = arith.constant 0 : index
    %c0_55 = arith.constant 0 : index
    %103 = vector.load %arg3[%c7_53, %c0_54, %c0_55] : memref<8x2x128xf32, #tpu.memory_space<vmem>>, vector<1x2x128xf32>
    %104 = vector.shape_cast %103 : vector<1x2x128xf32> to vector<2x128xf32>
    %105 = vector.extract_strided_slice %59 {offsets = [0, 7], sizes = [2, 1], strides = [1, 1]} : vector<2x8xf32> to vector<2x1xf32>
    %106 = vector.broadcast %105 : vector<2x1xf32> to vector<2x128xf32>
    %107 = arith.mulf %106, %104 : vector<2x128xf32>
    %108 = arith.addf %102, %107 : vector<2x128xf32>
    %c0_56 = arith.constant 0 : index
    %c0_57 = arith.constant 0 : index
    %109 = vector.load %arg5[%c0_56, %c0_57] : memref<2x128xf32, #tpu.memory_space<vmem>>, vector<2x128xf32>
    tpu.vector_store %arg5[%c0_56, %c0_57], %108 {strides = array<i32>} : memref<2x128xf32, #tpu.memory_space<vmem>>, vector<2x128xf32>,
    return
  }
  func.func @transform_0(%arg0: i32) -> (i32, i32) {
    %c0_i32 = arith.constant 0 : i32
    %c0_i32_0 = arith.constant 0 : i32
    return %arg0, %c0_i32 : i32, i32
  }
  func.func @transform_1(%arg0: i32) -> (i32, i32, i32) {
    %c0_i32 = arith.constant 0 : i32
    %c0_i32_0 = arith.constant 0 : i32
    %c0_i32_1 = arith.constant 0 : i32
    return %c0_i32, %arg0, %c0_i32_0 : i32, i32, i32
  }
  func.func @transform_2(%arg0: i32) -> (i32, i32, i32) {
    %c0_i32 = arith.constant 0 : i32
    %c0_i32_0 = arith.constant 0 : i32
    %c0_i32_1 = arith.constant 0 : i32
    return %c0_i32, %arg0, %c0_i32_0 : i32, i32, i32
  }
  func.func @transform_3(%arg0: i32) -> (i32, i32) {
    %c0_i32 = arith.constant 0 : i32
    %c0_i32_0 = arith.constant 0 : i32
    return %arg0, %c0_i32 : i32, i32
  }
  func.func @transform_4(%arg0: i32) -> (i32, i32) {
    %c0_i32 = arith.constant 0 : i32
    %c0_i32_0 = arith.constant 0 : i32
    return %arg0, %c0_i32 : i32, i32
  }
}

</mosaic_0001>

<llo_original>
// kernel: tpu_custom_call.1
$region0: #{tpu_custom_call.1}
  #allocation0 [shape = 'u32[]', space=smem, size = 0x4, offset = 0x4, fixed_abs, tag = 'smem constant byte address 0x4 - core index']
  #allocation1 [shape = 'u32[144,128]{1,0:T(1,128)}', space=vmem, size = 0x12000, scoped, tag = 'internal scratch']
  %s0 = inlined_call_operand.hbm [shape: f32[2,128], index: 0, kind: input, shape index: {}]
  %s1 = inlined_call_operand.hbm [shape: f32[8,2,128], index: 1, kind: input, shape index: {}]
  %s2 = inlined_call_operand.hbm [shape: f32[8,2,128], index: 2, kind: input, shape index: {}]
  %s3 = inlined_call_operand.vmem [shape: f32[2,8], index: 3, kind: input, shape index: {}]
  %s4 = inlined_call_operand.hbm [shape: f32[2,128], index: 4, kind: output, shape index: {}]
  %s5 = sld [smem:[#allocation0]]
  $region38: #{tpu_custom_call.1} parent=0
    _
  %s7 = ssub.s32 1, %s5
  %s8 = scalar_select 0, %s7, %s5
  $region1: #{tpu_custom_call.1} parent=0
    #allocation2 [shape = 'u8[1024]{0}', space=vmem, size = 0x400, scoped, tag = 'input window, operand 0, single buffered']
    #allocation3 [shape = 's32[1]{0}', space=sflag, size = 0x4, scoped, tag = 'scoped memory for tpu_custom_call.1']
    #allocation4 [shape = 's32[1]{0}', space=sflag, size = 0x4, scoped, tag = 'scoped memory for tpu_custom_call.1']
    #allocation5 [shape = 'u8[8192]{0}', space=vmem, size = 0x2000, scoped, tag = 'input window, operand 1, single buffered']
    #allocation6 [shape = 's32[1]{0}', space=sflag, size = 0x4, scoped, tag = 'scoped memory for tpu_custom_call.1']
    #allocation7 [shape = 'u8[8192]{0}', space=vmem, size = 0x2000, scoped, tag = 'input window, operand 2, single buffered']
    #allocation8 [shape = 'u8[1024]{0}', space=vmem, size = 0x400, scoped, tag = 'output window, operand 0, single buffered']
    %9 = vsyncpa [#allocation3], 0
    %10 = vsyncpa [#allocation6], 0
    %11 = vsyncpa [#allocation4], 0
    // Predicated region
    $region2: #{tpu_custom_call.1} parent=1 // pred_check
      _
    $region3: #{tpu_custom_call.1} parent=1 // pred_check_branch
      %13 = sbr.rel (0) target = $region5
    $region4: #{tpu_custom_call.1} parent=1 // pred_region
      %s15 = ssub.s32 32, 32
      %16 = vsyncadd [#allocation3], %s15
      %s18 = sshll.u32 [#allocation2], 4
      %s19 = int_to_ptr.vmem [resolvable:$true] %s18
      %21 = dma.hbm_to_vmem [thread:$0]  %s0, 32, %s19, [#allocation3]
    $region5: #{tpu_custom_call.1} parent=1 // pred_fallthru
      _
    // Predicated region
    $region6: #{tpu_custom_call.1} parent=1 // pred_check
      _
    $region7: #{tpu_custom_call.1} parent=1 // pred_check_branch
      %23 = sbr.rel (0) target = $region9
    $region8: #{tpu_custom_call.1} parent=1 // pred_region
      %s25 = ssub.s32 256, 256
      %26 = vsyncadd [#allocation6], %s25
      %s27 = sshll.u32 [#allocation5], 4
      %s28 = int_to_ptr.vmem [resolvable:$true] %s27
      %33 = dma.hbm_to_vmem [thread:$0]  %s1, 256, %s28, [#allocation6], 32, 32, 2
    $region9: #{tpu_custom_call.1} parent=1 // pred_fallthru
      _
    // Predicated region
    $region10: #{tpu_custom_call.1} parent=1 // pred_check
      _
    $region11: #{tpu_custom_call.1} parent=1 // pred_check_branch
      %35 = sbr.rel (0) target = $region13
    $region12: #{tpu_custom_call.1} parent=1 // pred_region
      %s37 = ssub.s32 256, 256
      %38 = vsyncadd [#allocation6], %s37
      %s39 = sshll.u32 [#allocation7], 4
      %s40 = int_to_ptr.vmem [resolvable:$true] %s39
      %45 = dma.hbm_to_vmem [thread:$0]  %s2, 256, %s40, [#allocation6], 32, 32, 2
    $region13: #{tpu_custom_call.1} parent=1 // pred_fallthru
      _
    // Predicated region
    $region14: #{tpu_custom_call.1} parent=1 // pred_check
      _
    $region15: #{tpu_custom_call.1} parent=1 // pred_check_branch
      %47 = sbr.rel (0) target = $region17
    $region16: #{tpu_custom_call.1} parent=1 // pred_region
      _
    $region17: #{tpu_custom_call.1} parent=1 // pred_fallthru
      _
    // Predicated region
    $region18: #{tpu_custom_call.1} parent=1 // pred_check
      _
    $region19: #{tpu_custom_call.1} parent=1 // pred_check_branch
      %49 = sbr.rel (0) target = $region21
    $region20: #{tpu_custom_call.1} parent=1 // pred_region
      %50 = dma.done [#allocation3], 32
    $region21: #{tpu_custom_call.1} parent=1 // pred_fallthru
      _
    // Predicated region
    $region22: #{tpu_custom_call.1} parent=1 // pred_check
      _
    $region23: #{tpu_custom_call.1} parent=1 // pred_check_branch
      %52 = sbr.rel (0) target = $region25
    $region24: #{tpu_custom_call.1} parent=1 // pred_region
      %53 = dma.done [#allocation6], 256
    $region25: #{tpu_custom_call.1} parent=1 // pred_fallthru
      _
    // Predicated region
    $region26: #{tpu_custom_call.1} parent=1 // pred_check
      _
    $region27: #{tpu_custom_call.1} parent=1 // pred_check_branch
      %55 = sbr.rel (0) target = $region29
    $region28: #{tpu_custom_call.1} parent=1 // pred_region
      %56 = dma.done [#allocation6], 256
    $region29: #{tpu_custom_call.1} parent=1 // pred_fallthru
      _
    %v57 = vld [vmem:[#allocation2] sm:$0x3]
    %v58 = vld [vmem:[#allocation5] sm:$0x3]
    %v59 = vmul.f32 %v57, %v58
    %vm60 = vcmask 1041408
    %v61 = vsel %vm60, %v59, 0.0
    %62 = vadd.xlane.f32.xlu0 %v61
    %v63 = vpop.xlane.xlu0 %62
    %s64 = scalar_lea.vmem [#allocation5], 2
    %v65 = vld [vmem:[%s64] sm:$0x3]
    %v66 = vmul.f32 %v57, %v65
    %v67 = vsel %vm60, %v66, 0.0
    %68 = vadd.xlane.f32.xlu0 %v67
    %v69 = vpop.xlane.xlu0 %68
    %s70 = scalar_lea.vmem [#allocation5], 4
    %v71 = vld [vmem:[%s70] sm:$0x3]
    %v72 = vmul.f32 %v57, %v71
    %v73 = vsel %vm60, %v72, 0.0
    %74 = vadd.xlane.f32.xlu0 %v73
    %v75 = vpop.xlane.xlu0 %74
    %s76 = scalar_lea.vmem [#allocation5], 6
    %v77 = vld [vmem:[%s76] sm:$0x3]
    %v78 = vmul.f32 %v57, %v77
    %v79 = vsel %vm60, %v78, 0.0
    %80 = vadd.xlane.f32.xlu0 %v79
    %v81 = vpop.xlane.xlu0 %80
    %s82 = scalar_lea.vmem [#allocation5], 8
    %v83 = vld [vmem:[%s82] sm:$0x3]
    %v84 = vmul.f32 %v57, %v83
    %v85 = vsel %vm60, %v84, 0.0
    %86 = vadd.xlane.f32.xlu0 %v85
    %v87 = vpop.xlane.xlu0 %86
    %s88 = scalar_lea.vmem [#allocation5], 10
    %v89 = vld [vmem:[%s88] sm:$0x3]
    %v90 = vmul.f32 %v57, %v89
    %v91 = vsel %vm60, %v90, 0.0
    %92 = vadd.xlane.f32.xlu0 %v91
    %v93 = vpop.xlane.xlu0 %92
    %s94 = scalar_lea.vmem [#allocation5], 12
    %v95 = vld [vmem:[%s94] sm:$0x3]
    %v96 = vmul.f32 %v57, %v95
    %v97 = vsel %vm60, %v96, 0.0
    %98 = vadd.xlane.f32.xlu0 %v97
    %v99 = vpop.xlane.xlu0 %98
    %s100 = scalar_lea.vmem [#allocation5], 14
    %v101 = vld [vmem:[%s100] sm:$0x3]
    %v102 = vmul.f32 %v57, %v101
    %v103 = vsel %vm60, %v102, 0.0
    %104 = vadd.xlane.f32.xlu0 %v103
    %v105 = vpop.xlane.xlu0 %104
    %vm106 = vcmask 7168
    %v107 = vsel %vm106, %v63, %v69
    %vm108 = vcmask 15360
    %v109 = vsel %vm108, %v107, %v75
    %vm110 = vcmask 23552
    %v111 = vsel %vm110, %v109, %v81
    %vm112 = vcmask 31744
    %v113 = vsel %vm112, %v111, %v87
    %vm114 = vcmask 39936
    %v115 = vsel %vm114, %v113, %v93
    %vm116 = vcmask 48128
    %v117 = vsel %vm116, %v115, %v99
    %vm118 = vcmask 56320
    %v119 = vsel %vm118, %v117, %v105
    %v120 = vld [vmem:[%s3] sm:$0x3]
    %vm121 = vcmask 58368
    %v122 = vsel %vm121, %v119, -inf
    %123 = vmax.xlane.f32.xlu0 %v122
    %v124 = vpop.xlane.xlu0 %123
    %v125 = vsub.f32 %v119, %v124
    %v126 = vmul.f32 %v125, 1.442695
    %v127 = vpow.pop %v126
    %v128 = vsel %vm121, %v127, 0.0
    %129 = vadd.xlane.f32.xlu0 %v128
    %v130 = vpop.xlane.xlu0 %129
    %v131 = vmul.f32 %v127, %v120
    %v132 = vand.u32 2147483647, %v131
    %v133 = vsel %vm121, %v132, 0.0
    %134 = vadd.xlane.f32.xlu0 %v133
    %v135 = vpop.xlane.xlu0 %134
    %v136 = vmul.f32 %v130, 1e-12
    %v137 = vmax.f32 %v135, %v136
    %v138 = vrcp.pop %v137
    %v139 = vmul.f32 %v131, %v138
    %v140 = vld [vmem:[#allocation7] sm:$0x3]
    %142 = vset.pattern.permute.xlu0 0
    %143 = vperm.xlu0 %142, %v139
    %v144 = vpop.permute.xlu0 %143
    %v146 = vmul.f32 %v144, %v140
    %v147 = vadd.f32 %v146, 0.0
    %s148 = scalar_lea.vmem [#allocation7], 2
    %v149 = vld [vmem:[%s148] sm:$0x3]
    %150 = vset.pattern.permute.xlu0 1
    %151 = vperm.xlu0 %150, %v139
    %v152 = vpop.permute.xlu0 %151
    %v154 = vmul.f32 %v152, %v149
    %v155 = vadd.f32 %v147, %v154
    %s156 = scalar_lea.vmem [#allocation7], 4
    %v157 = vld [vmem:[%s156] sm:$0x3]
    %158 = vset.pattern.permute.xlu0 2
    %159 = vperm.xlu0 %158, %v139
    %v160 = vpop.permute.xlu0 %159
    %v162 = vmul.f32 %v160, %v157
    %v163 = vadd.f32 %v155, %v162
    %s164 = scalar_lea.vmem [#allocation7], 6
    %v165 = vld [vmem:[%s164] sm:$0x3]
    %166 = vset.pattern.permute.xlu0 3
    %167 = vperm.xlu0 %166, %v139
    %v168 = vpop.permute.xlu0 %167
    %v170 = vmul.f32 %v168, %v165
    %v171 = vadd.f32 %v163, %v170
    %s172 = scalar_lea.vmem [#allocation7], 8
    %v173 = vld [vmem:[%s172] sm:$0x3]
    %174 = vset.pattern.permute.xlu0 4
    %175 = vperm.xlu0 %174, %v139
    %v176 = vpop.permute.xlu0 %175
    %v178 = vmul.f32 %v176, %v173
    %v179 = vadd.f32 %v171, %v178
    %s180 = scalar_lea.vmem [#allocation7], 10
    %v181 = vld [vmem:[%s180] sm:$0x3]
    %182 = vset.pattern.permute.xlu0 5
    %183 = vperm.xlu0 %182, %v139
    %v184 = vpop.permute.xlu0 %183
    %v186 = vmul.f32 %v184, %v181
    %v187 = vadd.f32 %v179, %v186
    %s188 = scalar_lea.vmem [#allocation7], 12
    %v189 = vld [vmem:[%s188] sm:$0x3]
    %190 = vset.pattern.permute.xlu0 6
    %191 = vperm.xlu0 %190, %v139
    %v192 = vpop.permute.xlu0 %191
    %v194 = vmul.f32 %v192, %v189
    %v195 = vadd.f32 %v187, %v194
    %s196 = scalar_lea.vmem [#allocation7], 14
    %v197 = vld [vmem:[%s196] sm:$0x3]
    %198 = vset.pattern.permute.xlu0 7
    %199 = vperm.xlu0 %198, %v139
    %v200 = vpop.permute.xlu0 %199
    %v202 = vmul.f32 %v200, %v197
    %v203 = vadd.f32 %v195, %v202
    %204 = vst [vmem:[#allocation8] sm:$0x3] %v203
    // Predicated region
    $region30: #{tpu_custom_call.1} parent=1 // pred_check
      _
    $region31: #{tpu_custom_call.1} parent=1 // pred_check_branch
      %206 = sbr.rel (0) target = $region33
    $region32: #{tpu_custom_call.1} parent=1 // pred_region
      %s208 = ssub.s32 32, 32
      %209 = vsyncadd [#allocation4], %s208
      %s211 = sshll.u32 [#allocation8], 4
      %s212 = int_to_ptr.vmem [resolvable:$true] %s211
      %214 = dma.vmem_to_hbm [thread:$0]  %s212, 32, %s4, [#allocation4]
    $region33: #{tpu_custom_call.1} parent=1 // pred_fallthru
      _
    // Predicated region
    $region34: #{tpu_custom_call.1} parent=1 // pred_check
      _
    $region35: #{tpu_custom_call.1} parent=1 // pred_check_branch
      %216 = sbr.rel (0) target = $region37
    $region36: #{tpu_custom_call.1} parent=1 // pred_region
      %217 = dma.done [#allocation4], 32
    $region37: #{tpu_custom_call.1} parent=1 // pred_fallthru
      _
    %218 = vsyncpa [#allocation3], 1
    %219 = vsyncpa [#allocation6], 1
    %220 = vsyncpa [#allocation4], 1

</llo_original>
